<compile_context>
chip_gen: v6e
topology: v6e:2x2x1
jax: 0.10.0
libtpu: 0.0.40
codegen_flags: <defaults>
</compile_context>

<pallas_src>
import math

import jax
import jax.numpy as jnp
from jax.experimental import pallas as pl
from jax.experimental.pallas import tpu as pltpu


def _round_up(x, m):
    return (x + m - 1) // m * m


def _direct_classifier_kernel(seq_ref, enm_ref, seq_w_ref, enm_w_ref, b_ref, out_ref):
    # (TM, D) @ (D, O) on the MXU, f32 accumulation.  Cast the activation tile
    # to the weight dtype in-register (free; hides under the DMA).
    a = seq_ref[...].astype(seq_w_ref.dtype)
    logits = jnp.dot(a, seq_w_ref[...], preferred_element_type=jnp.float32)   # (TM, O)
    # ENM scalar column contribution: (TM, 1) * (1, O) broadcast on the VPU.
    logits = logits + enm_ref[...].astype(jnp.float32) * enm_w_ref[...]
    out_ref[...] = (logits + b_ref[...]).astype(out_ref.dtype)


def prepare_direct_classifier_params(lin_w, lin_b, *, compute_dtype=jnp.float32):
    """One-time (cacheable) split/transpose of the (O, D+1) linear weight.

    Call this once per parameter set and reuse the result -- it is deliberately
    NOT on the per-forward path.
    """
    lin_w = jnp.asarray(lin_w)
    lin_b = jnp.asarray(lin_b)
    out_dim, d_plus_1 = lin_w.shape
    d = d_plus_1 - 1
    return {
        "seq_w": lin_w[:, :d].T.astype(compute_dtype),       # (D, O)
        "enm_w": lin_w[:, d:].T.astype(jnp.float32),          # (1, O)
        "bias": lin_b.reshape(1, out_dim).astype(jnp.float32),  # (1, O)
    }


def enm_adapted_direct_classifier(prepared, seq_embedding, enm_input, *, row_tile=4096):
    """logits = cat([seq_embedding, enm_input[..., None]], -1) @ W.T + b."""
    seq_w = prepared["seq_w"]                 # (D, O)
    enm_w = prepared["enm_w"]                 # (1, O)
    bias = prepared["bias"]                   # (1, O)
    D, O = seq_w.shape

    lead = seq_embedding.shape[:-1]
    assert seq_embedding.shape[-1] == D
    assert enm_input.shape == lead
    N = math.prod(lead)

    # Flatten leading dims.  No padding, no dtype cast here (both would cost an
    # extra full HBM pass for a bandwidth-bound kernel).
    seq2d = seq_embedding.reshape(N, D)
    enm_col = enm_input.reshape(N, 1)

    # Row tile: large enough that per-step overhead disappears under DMA, but
    # capped so the grid has >= 2 blocks whenever possible (dual-TC sharding).
    TM = min(int(row_tile), _round_up(pl.cdiv(N, 2), 8))
    TM = max(TM, 8)
    if TM >= N:
        TM = N                                # single block == full dim (always legal)
    grid = (pl.cdiv(N, TM),)

    in_bytes = (seq2d.size * seq2d.dtype.itemsize
                + enm_col.size * enm_col.dtype.itemsize
                + seq_w.size * seq_w.dtype.itemsize
                + enm_w.size * enm_w.dtype.itemsize
                + bias.size * bias.dtype.itemsize)
    cost = pl.CostEstimate(
        flops=2 * N * D * O + 3 * N * O,
        transcendentals=0,
        bytes_accessed=int(in_bytes + N * O * 4),
    )

    out = pl.pallas_call(
        _direct_classifier_kernel,
        out_shape=jax.ShapeDtypeStruct((N, O), jnp.float32),
        grid=grid,
        in_specs=[
            pl.BlockSpec((TM, D), lambda i: (i, 0)),      # seq tile (pipelined)
            pl.BlockSpec((TM, 1), lambda i: (i, 0)),      # enm column tile
            pl.BlockSpec((D, O), lambda i: (0, 0)),       # VMEM-resident weight
            pl.BlockSpec((1, O), lambda i: (0, 0)),       # resident enm weight row
            pl.BlockSpec((1, O), lambda i: (0, 0)),       # resident bias row
        ],
        out_specs=pl.BlockSpec((TM, O), lambda i: (i, 0)),
        compiler_params=pltpu.CompilerParams(
            dimension_semantics=("parallel",)),
        cost_estimate=cost,
    )(seq2d, enm_col, seq_w, enm_w, bias)

    return out.reshape(*lead, O)


def _reference(lin_w, lin_b, seq_embedding, enm_input):
    """Pure-JAX reference mirroring the PyTorch forward."""
    comb = jnp.concatenate([seq_embedding, enm_input[..., None]], axis=-1)
    return comb @ lin_w.T + lin_b


if __name__ == "__main__":
    B, L, SEQ_DIM, OUT_DIM = 2, 16, 32, 4

    key = jax.random.PRNGKey(0)
    k_seq, k_enm, k_w, k_b = jax.random.split(key, 4)

    seq_embedding = jax.random.normal(k_seq, (B, L, SEQ_DIM), jnp.float32)
    enm_input = jax.random.normal(k_enm, (B, L), jnp.float32)
    lin_w = jax.random.normal(k_w, (OUT_DIM, SEQ_DIM + 1), jnp.float32) * (
        1.0 / (SEQ_DIM + 1) ** 0.5)
    lin_b = jax.random.normal(k_b, (OUT_DIM,), jnp.float32) * 0.1

    ref = _reference(lin_w, lin_b, seq_embedding, enm_input)

    # f32 path (exact).  Weight prep is done once and reused.
    prepared = prepare_direct_classifier_params(lin_w, lin_b)
    logits = enm_adapted_direct_classifier(prepared, seq_embedding, enm_input)
    logits = jax.block_until_ready(logits)
    assert logits.shape == (B, L, OUT_DIM)
    assert bool(jnp.all(jnp.isfinite(logits)))
    assert bool(jnp.allclose(logits, ref, atol=1e-4, rtol=1e-4))

    # Ragged-row case (N not a multiple of the tile) to exercise masked writes.
    L2 = 13
    seq2 = seq_embedding[:, :L2]
    enm2 = enm_input[:, :L2]
    ref2 = _reference(lin_w, lin_b, seq2, enm2)
    logits2 = jax.block_until_ready(
        enm_adapted_direct_classifier(prepared, seq2, enm2))
    assert logits2.shape == (B, L2, OUT_DIM)
    assert bool(jnp.allclose(logits2, ref2, atol=1e-4, rtol=1e-4))

    # Optional bf16 MXU path (in-kernel cast; only worthwhile when activations
    # are already bf16 in HBM -- f32 is the default for mem-bound shapes).
    prepared_bf16 = prepare_direct_classifier_params(
        lin_w, lin_b, compute_dtype=jnp.bfloat16)
    logits_bf16 = jax.block_until_ready(
        enm_adapted_direct_classifier(prepared_bf16, seq_embedding, enm_input))
    assert bool(jnp.allclose(logits_bf16, ref, atol=5e-2, rtol=5e-2))

    print("KERNEL_OK")
</pallas_src>

<mosaic_0001>
module attributes {stable_mosaic.version = 11 : i64} {
  func.func @_direct_classifier_kernel(%arg0: i32, %arg1: memref<16x32xf32, #tpu.memory_space<vmem>>, %arg2: memref<16x1xf32, #tpu.memory_space<vmem>>, %arg3: memref<32x4xf32, #tpu.memory_space<vmem>>, %arg4: memref<1x4xf32, #tpu.memory_space<vmem>>, %arg5: memref<1x4xf32, #tpu.memory_space<vmem>>, %arg6: memref<16x4xf32, #tpu.memory_space<vmem>>) attributes {dimension_semantics = [#tpu.dimension_semantics<parallel>], iteration_bounds = array<i64: 2>, scalar_prefetch = 0 : i64, scratch_operands = 0 : i64, tpu.core_type = #tpu.core_type<tc>, window_params = [{transform_indices = @transform_0, window_bounds = array<i64: 16, 32>}, {transform_indices = @transform_1, window_bounds = array<i64: 16, 1>}, {pipeline_mode = #tpu.pipeline_mode<synchronous>, transform_indices = @transform_2, window_bounds = array<i64: 32, 4>}, {pipeline_mode = #tpu.pipeline_mode<synchronous>, transform_indices = @transform_3, window_bounds = array<i64: 1, 4>}, {pipeline_mode = #tpu.pipeline_mode<synchronous>, transform_indices = @transform_4, window_bounds = array<i64: 1, 4>}, {transform_indices = @transform_5, window_bounds = array<i64: 16, 4>}]} {
    %c0 = arith.constant 0 : index
    %c0_0 = arith.constant 0 : index
    %0 = vector.load %arg1[%c0, %c0_0] : memref<16x32xf32, #tpu.memory_space<vmem>>, vector<16x32xf32>
    %c0_1 = arith.constant 0 : index
    %c0_2 = arith.constant 0 : index
    %1 = vector.load %arg3[%c0_1, %c0_2] : memref<32x4xf32, #tpu.memory_space<vmem>>, vector<32x4xf32>
    %cst = arith.constant dense<0.000000e+00> : vector<16x4xf32>
    %2 = tpu.matmul %0, %1, %cst {dimension_numbers = #tpu.dot_dimension_numbers<[1], [0], [0], [1], [0, 0, 1, 1], [], []>} : vector<16x32xf32>, vector<32x4xf32>, vector<16x4xf32> -> vector<16x4xf32>
    %c0_3 = arith.constant 0 : index
    %c0_4 = arith.constant 0 : index
    %3 = vector.load %arg2[%c0_3, %c0_4] : memref<16x1xf32, #tpu.memory_space<vmem>>, vector<16x1xf32>
    %c0_5 = arith.constant 0 : index
    %c0_6 = arith.constant 0 : index
    %4 = vector.load %arg4[%c0_5, %c0_6] : memref<1x4xf32, #tpu.memory_space<vmem>>, vector<1x4xf32>
    %5 = vector.broadcast %3 : vector<16x1xf32> to vector<16x4xf32>
    %6 = vector.broadcast %4 : vector<1x4xf32> to vector<16x4xf32>
    %7 = arith.mulf %5, %6 : vector<16x4xf32>
    %8 = arith.addf %2, %7 : vector<16x4xf32>
    %c0_7 = arith.constant 0 : index
    %c0_8 = arith.constant 0 : index
    %9 = vector.load %arg5[%c0_7, %c0_8] : memref<1x4xf32, #tpu.memory_space<vmem>>, vector<1x4xf32>
    %10 = vector.broadcast %9 : vector<1x4xf32> to vector<16x4xf32>
    %11 = arith.addf %8, %10 : vector<16x4xf32>
    %c0_9 = arith.constant 0 : index
    %c0_10 = arith.constant 0 : index
    %12 = vector.load %arg6[%c0_9, %c0_10] : memref<16x4xf32, #tpu.memory_space<vmem>>, vector<16x4xf32>
    tpu.vector_store %arg6[%c0_9, %c0_10], %11 {strides = array<i32>} : memref<16x4xf32, #tpu.memory_space<vmem>>, vector<16x4xf32>,
    return
  }
  func.func @transform_0(%arg0: i32) -> (i32, i32) {
    %c0_i32 = arith.constant 0 : i32
    %c0_i32_0 = arith.constant 0 : i32
    return %arg0, %c0_i32 : i32, i32
  }
  func.func @transform_1(%arg0: i32) -> (i32, i32) {
    %c0_i32 = arith.constant 0 : i32
    %c0_i32_0 = arith.constant 0 : i32
    return %arg0, %c0_i32 : i32, i32
  }
  func.func @transform_2(%arg0: i32) -> (i32, i32) {
    %c0_i32 = arith.constant 0 : i32
    %c0_i32_0 = arith.constant 0 : i32
    %c0_i32_1 = arith.constant 0 : i32
    return %c0_i32, %c0_i32_0 : i32, i32
  }
  func.func @transform_3(%arg0: i32) -> (i32, i32) {
    %c0_i32 = arith.constant 0 : i32
    %c0_i32_0 = arith.constant 0 : i32
    %c0_i32_1 = arith.constant 0 : i32
    return %c0_i32, %c0_i32_0 : i32, i32
  }
  func.func @transform_4(%arg0: i32) -> (i32, i32) {
    %c0_i32 = arith.constant 0 : i32
    %c0_i32_0 = arith.constant 0 : i32
    %c0_i32_1 = arith.constant 0 : i32
    return %c0_i32, %c0_i32_0 : i32, i32
  }
  func.func @transform_5(%arg0: i32) -> (i32, i32) {
    %c0_i32 = arith.constant 0 : i32
    %c0_i32_0 = arith.constant 0 : i32
    return %arg0, %c0_i32 : i32, i32
  }
}

</mosaic_0001>

<llo_original>
// kernel: tpu_custom_call.1
$region0: #{tpu_custom_call.1}
  #allocation0 [shape = 'u32[]', space=smem, size = 0x4, offset = 0x4, fixed_abs, tag = 'smem constant byte address 0x4 - core index']
  #allocation1 [shape = 'u32[144,128]{1,0:T(1,128)}', space=vmem, size = 0x12000, scoped, tag = 'internal scratch']
  %s0 = inlined_call_operand.vmem [shape: f32[32,32], index: 0, kind: input, shape index: {}]
  %s1 = inlined_call_operand.vmem [shape: f32[32,1], index: 1, kind: input, shape index: {}]
  %s2 = inlined_call_operand.vmem [shape: f32[32,4], index: 2, kind: input, shape index: {}]
  %s3 = inlined_call_operand.vmem [shape: f32[1,4], index: 3, kind: input, shape index: {}]
  %s4 = inlined_call_operand.vmem [shape: f32[1,4], index: 4, kind: input, shape index: {}]
  %s5 = inlined_call_operand.vmem [shape: f32[32,4], index: 5, kind: output, shape index: {}]
  %s6 = sld [smem:[#allocation0]]
  $region53: #{tpu_custom_call.1} parent=0
    _
  %s8 = ssub.s32 1, %s6
  %s9 = scalar_select 0, %s8, %s6
  loop: start=0, step=1, limit=4
  $region2: #{tpu_custom_call.1} parent=0 // loop_pre_header
    _
  $region3: #{tpu_custom_call.1} parent=0 // loop_header
    %s11 = sphi 0, %s15
    %p12 = scmp.ge.s32.totalorder %s11, 4
    %s21 = sphi 0, %s23
    %s24 = sphi 0, %s21
    %s25 = sphi 0, %s24
    %s41 = sphi 0, %s25
    %s47 = sphi 0, %s49
    %s50 = sphi 0, %s47
    %s51 = sphi 0, %s50
    %s67 = sphi 0, %s51
    %s71 = sphi 0, %s71
    %s73 = sphi 0, %s71
    %s74 = sphi 0, %s73
    %s88 = sphi 0, %s74
    %s92 = sphi 0, %s92
    %s94 = sphi 0, %s92
    %s95 = sphi 0, %s94
    %s109 = sphi 0, %s95
    %s113 = sphi 0, %s113
    %s115 = sphi 0, %s113
    %s116 = sphi 0, %s115
    %s130 = sphi 0, %s116
    %s136 = sphi 0, %s138
    %s139 = sphi 0, %s136
    %s140 = sphi 0, %s139
    %s156 = sphi 0, %s140
  $region4: #{tpu_custom_call.1} parent=0 // loop_header_branch
    %14 = sbr.rel (%p12) target = $region8
  $region5: #{tpu_custom_call.1} parent=0 // loop_body
    %s16 = ssub.s32 %s11, 1
    %s17 = ssub.s32 %s11, 2
    %s18 = sadd.s32 %s11, 1
    %s19 = ssub.s32 %s11, %s18
    %p20 = scmp.eq.s32.totalorder %s19, 0
    %s22 = sadd.s32 %s21, 1
    %s23 = scalar_select %p20, %s21, %s22
    %p26 = pneg %p20
    %p27 = scmp.eq.s32.totalorder %s11, 1
    %p28 = por %p26, %p27
    %p29 = scmp.ne.s32.totalorder %s21, %s24
    %p30 = scmp.eq.s32.totalorder %s11, 0
    %p31 = por %p29, %p30
    %p32 = scmp.ne.s32.totalorder %s21, %s24
    %p33 = scmp.eq.s32.totalorder %s16, 1
    %p34 = por %p32, %p33
    %p35 = scmp.ne.s32.totalorder %s24, %s25
    %p36 = scmp.eq.s32.totalorder %s16, 0
    %p37 = por %p35, %p36
    %p38 = scmp.ne.s32.totalorder %s24, %s25
    %p39 = scmp.eq.s32.totalorder %s17, 1
    %p40 = por %p38, %p39
    %p42 = scmp.ne.s32.totalorder %s25, %s41
    %p43 = scmp.eq.s32.totalorder %s17, 0
    %p44 = por %p42, %p43
    %s45 = ssub.s32 %s11, %s18
    %p46 = scmp.eq.s32.totalorder %s45, 0
    %s48 = sadd.s32 %s47, 1
    %s49 = scalar_select %p46, %s47, %s48
    %p52 = pneg %p46
    %p53 = scmp.eq.s32.totalorder %s11, 1
    %p54 = por %p52, %p53
    %p55 = scmp.ne.s32.totalorder %s47, %s50
    %p56 = scmp.eq.s32.totalorder %s11, 0
    %p57 = por %p55, %p56
    %p58 = scmp.ne.s32.totalorder %s47, %s50
    %p59 = scmp.eq.s32.totalorder %s16, 1
    %p60 = por %p58, %p59
    %p61 = scmp.ne.s32.totalorder %s50, %s51
    %p62 = scmp.eq.s32.totalorder %s16, 0
    %p63 = por %p61, %p62
    %p64 = scmp.ne.s32.totalorder %s50, %s51
    %p65 = scmp.eq.s32.totalorder %s17, 1
    %p66 = por %p64, %p65
    %p68 = scmp.ne.s32.totalorder %s51, %s67
    %p69 = scmp.eq.s32.totalorder %s17, 0
    %p70 = por %p68, %p69
    %s72 = sadd.s32 %s71, 1
    %p75 = scmp.eq.s32.totalorder %s11, 1
    %p76 = scmp.ne.s32.totalorder %s71, %s73
    %p77 = scmp.eq.s32.totalorder %s11, 0
    %p78 = por %p76, %p77
    %p79 = scmp.ne.s32.totalorder %s71, %s73
    %p80 = scmp.eq.s32.totalorder %s16, 1
    %p81 = por %p79, %p80
    %p82 = scmp.ne.s32.totalorder %s73, %s74
    %p83 = scmp.eq.s32.totalorder %s16, 0
    %p84 = por %p82, %p83
    %p85 = scmp.ne.s32.totalorder %s73, %s74
    %p86 = scmp.eq.s32.totalorder %s17, 1
    %p87 = por %p85, %p86
    %p89 = scmp.ne.s32.totalorder %s74, %s88
    %p90 = scmp.eq.s32.totalorder %s17, 0
    %p91 = por %p89, %p90
    %s93 = sadd.s32 %s92, 1
    %p96 = scmp.eq.s32.totalorder %s11, 1
    %p97 = scmp.ne.s32.totalorder %s92, %s94
    %p98 = scmp.eq.s32.totalorder %s11, 0
    %p99 = por %p97, %p98
    %p100 = scmp.ne.s32.totalorder %s92, %s94
    %p101 = scmp.eq.s32.totalorder %s16, 1
    %p102 = por %p100, %p101
    %p103 = scmp.ne.s32.totalorder %s94, %s95
    %p104 = scmp.eq.s32.totalorder %s16, 0
    %p105 = por %p103, %p104
    %p106 = scmp.ne.s32.totalorder %s94, %s95
    %p107 = scmp.eq.s32.totalorder %s17, 1
    %p108 = por %p106, %p107
    %p110 = scmp.ne.s32.totalorder %s95, %s109
    %p111 = scmp.eq.s32.totalorder %s17, 0
    %p112 = por %p110, %p111
    %s114 = sadd.s32 %s113, 1
    %p117 = scmp.eq.s32.totalorder %s11, 1
    %p118 = scmp.ne.s32.totalorder %s113, %s115
    %p119 = scmp.eq.s32.totalorder %s11, 0
    %p120 = por %p118, %p119
    %p121 = scmp.ne.s32.totalorder %s113, %s115
    %p122 = scmp.eq.s32.totalorder %s16, 1
    %p123 = por %p121, %p122
    %p124 = scmp.ne.s32.totalorder %s115, %s116
    %p125 = scmp.eq.s32.totalorder %s16, 0
    %p126 = por %p124, %p125
    %p127 = scmp.ne.s32.totalorder %s115, %s116
    %p128 = scmp.eq.s32.totalorder %s17, 1
    %p129 = por %p127, %p128
    %p131 = scmp.ne.s32.totalorder %s116, %s130
    %p132 = scmp.eq.s32.totalorder %s17, 0
    %p133 = por %p131, %p132
    %s134 = ssub.s32 %s11, %s18
    %p135 = scmp.eq.s32.totalorder %s134, 0
    %s137 = sadd.s32 %s136, 1
    %s138 = scalar_select %p135, %s136, %s137
    %p141 = pneg %p135
    %p142 = scmp.eq.s32.totalorder %s11, 1
    %p143 = por %p141, %p142
    %p144 = scmp.ne.s32.totalorder %s136, %s139
    %p145 = scmp.eq.s32.totalorder %s11, 0
    %p146 = por %p144, %p145
    %p147 = scmp.ne.s32.totalorder %s136, %s139
    %p148 = scmp.eq.s32.totalorder %s16, 1
    %p149 = por %p147, %p148
    %p150 = scmp.ne.s32.totalorder %s139, %s140
    %p151 = scmp.eq.s32.totalorder %s16, 0
    %p152 = por %p150, %p151
    %p153 = scmp.ne.s32.totalorder %s139, %s140
    %p154 = scmp.eq.s32.totalorder %s17, 1
    %p155 = por %p153, %p154
    %p157 = scmp.ne.s32.totalorder %s140, %s156
    %p158 = scmp.eq.s32.totalorder %s17, 0
    %p159 = por %p157, %p158
    %p160 = scmp.le.s32.totalorder 1, %s11
    %p161 = scmp.lt.s32.totalorder %s11, 3
    %p162 = pnand %p160, %p161
    %p163 = pneg %p162
    // Predicated region
    $region9: #{tpu_custom_call.1} parent=5 // pred_check
      _
    $region10: #{tpu_custom_call.1} parent=5 // pred_check_branch
      %165 = sbr.rel (%p162) target = $region12
    $region11: #{tpu_custom_call.1} parent=5 // pred_region
      %s166 = ssub.s32 %s11, 1
      // Predicated region
      $region13: #{tpu_custom_call.1} parent=11 // pred_check
        %p167 = pneg %p84
      $region14: #{tpu_custom_call.1} parent=11 // pred_check_branch
        %169 = sbr.rel (%p167) target = $region16
      $region15: #{tpu_custom_call.1} parent=11 // pred_region
        _
      $region16: #{tpu_custom_call.1} parent=11 // pred_fallthru
        _
      // Predicated region
      $region17: #{tpu_custom_call.1} parent=11 // pred_check
        %p170 = pneg %p105
      $region18: #{tpu_custom_call.1} parent=11 // pred_check_branch
        %172 = sbr.rel (%p170) target = $region20
      $region19: #{tpu_custom_call.1} parent=11 // pred_region
        _
      $region20: #{tpu_custom_call.1} parent=11 // pred_fallthru
        _
      // Predicated region
      $region21: #{tpu_custom_call.1} parent=11 // pred_check
        %p173 = pneg %p126
      $region22: #{tpu_custom_call.1} parent=11 // pred_check_branch
        %175 = sbr.rel (%p173) target = $region24
      $region23: #{tpu_custom_call.1} parent=11 // pred_region
        _
      $region24: #{tpu_custom_call.1} parent=11 // pred_fallthru
        _
    $region12: #{tpu_custom_call.1} parent=5 // pred_fallthru
      _
    %p176 = scmp.lt.s32.totalorder %s11, 2
    // Predicated region
    $region25: #{tpu_custom_call.1} parent=5 // pred_check
      %p177 = pneg %p176
    $region26: #{tpu_custom_call.1} parent=5 // pred_check_branch
      %179 = sbr.rel (%p177) target = $region28
    $region27: #{tpu_custom_call.1} parent=5 // pred_region
      // Predicated region
      $region29: #{tpu_custom_call.1} parent=27 // pred_check
        %p180 = pneg %p31
      $region30: #{tpu_custom_call.1} parent=27 // pred_check_branch
        %182 = sbr.rel (%p180) target = $region32
      $region31: #{tpu_custom_call.1} parent=27 // pred_region
        %s183 = smul.u32 2, %s11
        %p184 = scmp.lt.s32.totalorder %s183, 3
        %s185 = scalar_select %p184, %s183, 3
        %s186 = smul.addr %s185, 8
        %s187 = scalar_lea.vmem %s0, %s186
        %s188 = smul.u32 2, %s11
      $region32: #{tpu_custom_call.1} parent=27 // pred_fallthru
        _
      // Predicated region
      $region33: #{tpu_custom_call.1} parent=27 // pred_check
        %p189 = pneg %p57
      $region34: #{tpu_custom_call.1} parent=27 // pred_check_branch
        %191 = sbr.rel (%p189) target = $region36
      $region35: #{tpu_custom_call.1} parent=27 // pred_region
        %s192 = smul.u32 2, %s11
        %p193 = scmp.lt.s32.totalorder %s192, 3
        %s194 = scalar_select %p193, %s192, 3
        %s195 = smul.addr %s194, 8
        %s196 = scalar_lea.vmem %s1, %s195
        %s197 = smul.u32 2, %s11
      $region36: #{tpu_custom_call.1} parent=27 // pred_fallthru
        _
    $region28: #{tpu_custom_call.1} parent=5 // pred_fallthru
      _
    %p198 = scmp.le.s32.totalorder 1, %s11
    %p199 = scmp.lt.s32.totalorder %s11, 3
    %p200 = pnand %p198, %p199
    %p201 = pneg %p200
    // Predicated region
    $region37: #{tpu_custom_call.1} parent=5 // pred_check
      _
    $region38: #{tpu_custom_call.1} parent=5 // pred_check_branch
      %203 = sbr.rel (%p200) target = $region40
    $region39: #{tpu_custom_call.1} parent=5 // pred_region
      %s204 = ssub.s32 %s11, 1
      %s205 = smul.u32 2, %s16
      %p206 = scmp.lt.s32.totalorder %s205, 3
      %s207 = scalar_select %p206, %s205, 3
      %s208 = smul.addr %s207, 8
      %s209 = scalar_lea.vmem %s0, %s208
      %p210 = pneg %p37
      %p211 = pneg %p34
      %s212 = smul.u32 2, %s16
      %p213 = scmp.lt.s32.totalorder %s212, 3
      %s214 = scalar_select %p213, %s212, 3
      %s215 = smul.addr %s214, 8
      %s216 = scalar_lea.vmem %s1, %s215
      %p217 = pneg %p63
      %p218 = pneg %p60
      %p219 = pneg %p84
      %p220 = pneg %p81
      %p221 = pneg %p105
      %p222 = pneg %p102
      %p223 = pneg %p126
      %p224 = pneg %p123
      %p225 = pneg %p152
      %p226 = pneg %p149
      %s227 = smul.u32 2, %s16
      %p228 = scmp.lt.s32.totalorder %s227, 3
      %s229 = scalar_select %p228, %s227, 3
      %s230 = smul.addr %s229, 8
      %s231 = scalar_lea.vmem %s5, %s230
      %s232 = smul.u32 2, %s16
      %p233 = scmp.lt.s32.totalorder %s232, 3
      %s234 = scalar_select %p233, %s232, 3
      %s235 = smul.addr %s234, 8
      %s236 = scalar_lea.vmem %s0, %s235
      %s237 = smul.u32 2, %s16
      %s238 = smul.u32 2, %s16
      %p239 = scmp.lt.s32.totalorder %s238, 3
      %s240 = scalar_select %p239, %s238, 3
      %s241 = smul.addr %s240, 8
      %s242 = scalar_lea.vmem %s1, %s241
      %s243 = smul.u32 2, %s16
      %s244 = smul.u32 2, %s16
      %p245 = scmp.lt.s32.totalorder %s244, 3
      %s246 = scalar_select %p245, %s244, 3
      %s247 = smul.addr %s246, 8
      %s248 = scalar_lea.vmem %s5, %s247
      %s249 = smul.u32 2, %s16
      %v250 = vld [vmem:[%s236] sm:$0xff]
      %v251 = vld [vmem:[%s236 + $0x8] sm:$0xff]
      %v252 = vld [vmem:[%s2] sm:$0xff]
      %v253 = vld [vmem:[%s2 + $0x8] sm:$0xff]
      %v254 = vld [vmem:[%s2 + $0x10] sm:$0xff]
      %v255 = vld [vmem:[%s2 + $0x18] sm:$0xff]
      %v256 = vld [vmem:[%s242] sm:$0xff]
      %v257 = vld [vmem:[%s242 + $0x8] sm:$0xff]
      %v258 = vld [vmem:[%s3] sm:$0x1]
      %260 = vset.pattern.permute.xlu0 0
      %261 = vperm.xlu0 %260, %v256
      %v262 = vpop.permute.xlu0 %261
      %265 = vset.pattern.permute.xlu0 0
      %266 = vperm.xlu0 %265, %v257
      %v267 = vpop.permute.xlu0 %266
      %v270 = vlaneseq
      %v271 = vshrl.u32 %v270, 7
      %v272 = vsub.s32 0, %v271
      %v273 = vrot.slane %v258, %v272
      %v275 = vmul.f32 %v262, %v273
      %v276 = vmul.f32 %v267, %v273
      %vm277 = vcmask 261120
      %v279 = vsel %vm277, %v250, 0
      %v282 = vsel %vm277, %v251, 0
      %284 = vmatprep.subr.mxu0 0.0
      %285 = vmatpush1.msra.mxu0 0.0
      %286 = vmatprep.subr.mxu0 0.0
      %287 = vmatpush1.msra.mxu0 0.0
      %288 = vmatprep.subr.mxu0 0.0
      %289 = vmatpush1.msra.mxu0 0.0
      %290 = vmatprep.subr.mxu0 0.0
      %291 = vmatpush1.msra.mxu0 0.0
      %292 = vmatprep.subr.mxu0 0.0
      %293 = vmatpush1.msra.mxu0 0.0
      %294 = vmatprep.subr.mxu0 0.0
      %295 = vmatpush1.msra.mxu0 0.0
      %296 = vmatprep.subr.mxu0 0.0
      %297 = vmatpush1.msra.mxu0 0.0
      %298 = vmatprep.subr.mxu0 0.0
      %299 = vmatpush1.msra.mxu0 0.0
      %300 = vmatprep.subr.mxu0 0.0
      %301 = vmatpush1.msra.mxu0 0.0
      %302 = vmatprep.subr.mxu0 0.0
      %303 = vmatpush1.msra.mxu0 0.0
      %304 = vmatprep.subr.mxu0 0.0
      %305 = vmatpush1.msra.mxu0 0.0
      %306 = vmatprep.subr.mxu0 0.0
      %307 = vmatpush1.msra.mxu0 0.0
      %308 = vmatprep.subr.mxu0 0.0
      %309 = vmatpush1.msra.mxu0 %v255
      %310 = vmatprep.subr.mxu0 0.0
      %311 = vmatpush1.msra.mxu0 %v254
      %312 = vmatprep.subr.mxu0 0.0
      %313 = vmatpush1.msra.mxu0 %v253
      %314 = vmatprep.subr.mxu0 0.0
      %315 = vmatpush1.msra.mxu0 %v252
      %316 = vmatprep.subr.mxu0 0.0
      %317 = vmatpush2.msra.mxu0 0.0
      %318 = vmatprep.subr.mxu0 0.0
      %319 = vmatpush2.msra.mxu0 0.0
      %320 = vmatprep.subr.mxu0 0.0
      %321 = vmatpush2.msra.mxu0 0.0
      %322 = vmatprep.subr.mxu0 0.0
      %323 = vmatpush2.msra.mxu0 0.0
      %324 = vmatprep.subr.mxu0 0.0
      %325 = vmatpush2.msra.mxu0 0.0
      %326 = vmatprep.subr.mxu0 0.0
      %327 = vmatpush2.msra.mxu0 0.0
      %328 = vmatprep.subr.mxu0 0.0
      %329 = vmatpush2.msra.mxu0 0.0
      %330 = vmatprep.subr.mxu0 0.0
      %331 = vmatpush2.msra.mxu0 0.0
      %332 = vmatprep.subr.mxu0 0.0
      %333 = vmatpush2.msra.mxu0 0.0
      %334 = vmatprep.subr.mxu0 0.0
      %335 = vmatpush2.msra.mxu0 0.0
      %336 = vmatprep.subr.mxu0 0.0
      %337 = vmatpush2.msra.mxu0 0.0
      %338 = vmatprep.subr.mxu0 0.0
      %339 = vmatpush2.msra.mxu0 0.0
      %340 = vmatprep.subr.mxu0 0.0
      %341 = vmatpush2.msra.mxu0 0.0
      %342 = vmatprep.subr.mxu0 0.0
      %343 = vmatpush2.msra.mxu0 0.0
      %344 = vmatprep.subr.mxu0 0.0
      %345 = vmatpush2.msra.mxu0 0.0
      %346 = vmatprep.subr.mxu0 0.0
      %347 = vmatpush2.msra.mxu0 0.0
      %348 = vmatprep.mubr.f32.mxu0 0.0
      %349 = vmatmul.mubr.f32.gmra.mxu0 %v279
      %v350 = vpop.f32.mrf.mxu0
      %v351 = vadd.f32 %v275, %v350
      %v352 = vpop.f32.mrf.mxu0
      %353 = vmatprep.mubr.f32.mxu0 0.0
      %354 = vmatmul.mubr.f32.gmra.mxu0 %v282
      %v355 = vpop.f32.mrf.mxu0
      %v356 = vadd.f32 %v276, %v355
      %v357 = vpop.f32.mrf.mxu0
      %358 = vdwg.mxu0
      %v359 = vld [vmem:[%s4] sm:$0x1]
      %v361 = vlaneseq
      %v362 = vshrl.u32 %v361, 7
      %v363 = vsub.s32 0, %v362
      %v364 = vrot.slane %v359, %v363
      %v366 = vadd.f32 %v351, %v364
      %v367 = vadd.f32 %v356, %v364
      %vm368 = vcmask 31744
      %369 = vst.msk [vmem:[%s248] sm:$0xff] %vm368, %v366
      %370 = vst.msk [vmem:[%s248 + $0x8] sm:$0xff] %vm368, %v367
      %s371 = smul.u32 2, %s16
      %p372 = scmp.lt.s32.totalorder %s371, 3
      %s373 = scalar_select %p372, %s371, 3
      %s374 = smul.addr %s373, 8
      %s375 = scalar_lea.vmem %s5, %s374
      // Predicated region
      $region41: #{tpu_custom_call.1} parent=39 // pred_check
        %p376 = pneg %p149
      $region42: #{tpu_custom_call.1} parent=39 // pred_check_branch
        %378 = sbr.rel (%p376) target = $region44
      $region43: #{tpu_custom_call.1} parent=39 // pred_region
        %s379 = smul.u32 2, %s16
      $region44: #{tpu_custom_call.1} parent=39 // pred_fallthru
        _
    $region40: #{tpu_custom_call.1} parent=5 // pred_fallthru
      _
    %p380 = scmp.le.s32.totalorder 2, %s11
    // Predicated region
    $region45: #{tpu_custom_call.1} parent=5 // pred_check
      %p381 = pneg %p380
    $region46: #{tpu_custom_call.1} parent=5 // pred_check_branch
      %383 = sbr.rel (%p381) target = $region48
    $region47: #{tpu_custom_call.1} parent=5 // pred_region
      %s384 = ssub.s32 %s11, 2
      // Predicated region
      $region49: #{tpu_custom_call.1} parent=47 // pred_check
        %p385 = pneg %p155
      $region50: #{tpu_custom_call.1} parent=47 // pred_check_branch
        %387 = sbr.rel (%p385) target = $region52
      $region51: #{tpu_custom_call.1} parent=47 // pred_region
        %s388 = smul.u32 2, %s17
        %p389 = scmp.lt.s32.totalorder %s388, 3
        %s390 = scalar_select %p389, %s388, 3
        %s391 = smul.addr %s390, 8
        %s392 = scalar_lea.vmem %s5, %s391
      $region52: #{tpu_custom_call.1} parent=47 // pred_fallthru
        _
    $region48: #{tpu_custom_call.1} parent=5 // pred_fallthru
      _
  $region6: #{tpu_custom_call.1} parent=0 // loop_footer
    %s15 = sadd.s32 1, %s11
  $region7: #{tpu_custom_call.1} parent=0 // loop_footer_branch
    %10 = sbr.rel target = $region3
  $region8: #{tpu_custom_call.1} parent=0 // loop_exit
    _

</llo_original>
